<compile_context>
chip_gen: v7x
topology: tpu7x:2x2x1
jax: 0.10.0
libtpu: 0.0.40
codegen_flags: <defaults>
</compile_context>

<pallas_src>
import functools

import jax
import jax.numpy as jnp
from jax.experimental import pallas as pl
from jax.experimental.pallas import tpu as pltpu


def _round_up(n: int, m: int) -> int:
    return ((n + m - 1) // m) * m


def _cdiv(a: int, b: int) -> int:
    return (a + b - 1) // b


def _supports_bf16_activations() -> bool:
    """bf16 tanh only pays off where the VPU/EUP support bf16 (v6e / v7x)."""
    try:
        kind = jax.devices()[0].device_kind.lower()
    except Exception:
        return False
    return ("v6" in kind) or ("v7" in kind) or ("7x" in kind)


def _choose_batch_tile(B: int, block_b: int) -> tuple[int, int]:
    """Pick (bt, n_blocks): bt is a multiple of 128, n_blocks*bt >= B with < bt tail padding,
    and n_blocks >= 2 whenever B allows (so the 'parallel' axis can use both TCs on v7x)."""
    n_chunks = _cdiv(B, 128)                                   # 128-row chunks of the batch
    target_chunks = max(1, min(_round_up(block_b, 128) // 128, n_chunks))
    n_blocks = _cdiv(n_chunks, target_chunks)
    if n_blocks < 2 and n_chunks >= 2:
        n_blocks = 2
    bt = _cdiv(n_chunks, n_blocks) * 128
    n_blocks = _cdiv(n_chunks * 128, bt)
    return bt, n_blocks


def mlp_kernel(x_ref, w1t_ref, b1_ref, w23_ref, b23_ref, o_ref, *, act_bf16):
    """One batch tile.

    x_ref  : (bt, Din) f32   streamed tile of x in its natural layout
    w1t_ref: (H, Din)  bf16  layer-1 weight transposed, VMEM resident
    b1_ref : (H, 1)    f32   layer-1 bias column, VMEM resident
    w23_ref: (H, 1)    f32   folded head weight w2 @ w3, VMEM resident
    b23_ref: (1, 1)    f32   folded head bias, SMEM scalar
    o_ref  : (1, bt)   f32   lane-dense output tile
    """
    x_tile = x_ref[...].astype(jnp.bfloat16)                  # f32 -> bf16 cast on the VPU
    # (H, bt) = w1^T @ x^T : q@k^T-style dot_general contracting Din with Din (MXU, f32 acc).
    h = jax.lax.dot_general(
        w1t_ref[...], x_tile,
        dimension_numbers=(((1,), (1,)), ((), ())),
        preferred_element_type=jnp.float32)
    h = h + b1_ref[...]                                        # bias column, broadcast over lanes
    if act_bf16:
        h = jnp.tanh(h.astype(jnp.bfloat16)).astype(jnp.float32)   # bf16 EUP tanh (v6e/v7x)
    else:
        h = jnp.tanh(h)                                             # f32 tanh (v5e-safe)
    # Folded (Linear -> Linear) head: VPU multiply + sublane reduce -> lane-dense (1, bt).
    y = jnp.sum(h * w23_ref[...], axis=0, keepdims=True) + b23_ref[0, 0]
    o_ref[...] = y.astype(o_ref.dtype)


@functools.partial(jax.jit, static_argnames=("block_b", "act_bf16"))
def _forward_impl(x, params, *, block_b, act_bf16):
    w1, b1, w2, b2, w3, b3 = (
        params["w1"], params["b1"], params["w2"],
        params["b2"], params["w3"], params["b3"],
    )
    B, Din = x.shape
    H = w1.shape[1]

    # ---- exact offline fold of the two bias-only-separated Linear layers ----
    w23 = w2 @ w3                       # (H, 1)
    b23 = b2 @ w3 + b3                  # (1, 1)

    # Tiny, VMEM-resident weights.  H sits on the sublane axis -> no 128-padding needed.
    w1t = w1.T.astype(jnp.bfloat16)     # (H, Din) bf16 (MXU operand)
    b1c = b1.T                          # (H, 1)  f32

    # ---- batch tiling (lane axis of the output) ----
    bt, n_blocks = _choose_batch_tile(B, block_b)
    Bp = bt * n_blocks
    if Bp != B:
        # Tail padding only (< bt rows); padded rows produce garbage that is sliced off below.
        x = jnp.zeros((Bp, Din), x.dtype).at[:B, :].set(x)

    out_t = pl.pallas_call(
        functools.partial(mlp_kernel, act_bf16=act_bf16),
        out_shape=jax.ShapeDtypeStruct((1, Bp), jnp.float32),
        grid=(n_blocks,),
        in_specs=[
            pl.BlockSpec((bt, Din), lambda i: (i, 0)),           # x: streamed, natural layout
            pl.BlockSpec((H, Din), lambda i: (0, 0)),            # w1^T: VMEM resident
            pl.BlockSpec((H, 1), lambda i: (0, 0)),              # b1 column: VMEM resident
            pl.BlockSpec((H, 1), lambda i: (0, 0)),              # w2@w3 column: VMEM resident
            pl.BlockSpec(memory_space=pltpu.MemorySpace.SMEM),   # folded head bias scalar
        ],
        out_specs=pl.BlockSpec((1, bt), lambda i: (0, i)),       # lane-dense output slab
        compiler_params=pltpu.CompilerParams(
            dimension_semantics=("parallel",),                   # batch axis shards across TCs
            vmem_limit_bytes=32 * 1024 * 1024,                   # safe on v7x's 64 MiB VMEM
        ),
    )(x, w1t, b1c, w23, b23)

    return out_t[0, :B].reshape(B, 1)


def regression_model_forward(x, params, *, block_b=4096, act_bf16=None):
    """x: [B, input_size] f32. params: dict w1,b1,w2,b2,w3,b3 stored as [in, out]."""
    if act_bf16 is None:
        act_bf16 = _supports_bf16_activations()
    return _forward_impl(x, params, block_b=int(block_b), act_bf16=bool(act_bf16))


def init_params(key, input_size, hidden_size):
    """Deterministic init matching PyTorch nn.Linear default (uniform +-1/sqrt(fan_in))."""
    ks = jax.random.split(key, 6)

    def linear(kw, kb, fan_in, fan_out):
        bound = 1.0 / jnp.sqrt(float(fan_in))
        # stored as [in, out] so forward is x @ w
        w = jax.random.uniform(kw, (fan_in, fan_out), jnp.float32, -bound, bound)
        b = jax.random.uniform(kb, (1, fan_out), jnp.float32, -bound, bound)
        return w, b

    w1, b1 = linear(ks[0], ks[1], input_size, hidden_size)
    w2, b2 = linear(ks[2], ks[3], hidden_size, hidden_size)
    w3, b3 = linear(ks[4], ks[5], hidden_size, 1)
    return {"w1": w1, "b1": b1, "w2": w2, "b2": b2, "w3": w3, "b3": b3}


def reference_forward(x, p):
    """Pure f32 reference matching the PyTorch module exactly."""
    h = jnp.tanh(x @ p["w1"] + p["b1"])
    h = h @ p["w2"] + p["b2"]
    return h @ p["w3"] + p["b3"]


def reference_forward_matched(x, p):
    """Reference with the kernel's layer-1 numerics (bf16 operands, f32 accumulation) and the
    exact w2/w3 fold; tanh/head in f32."""
    w23 = p["w2"] @ p["w3"]
    b23 = p["b2"] @ p["w3"] + p["b3"]
    h = jnp.tanh(
        jnp.dot(x.astype(jnp.bfloat16), p["w1"].astype(jnp.bfloat16),
                preferred_element_type=jnp.float32) + p["b1"])
    return h @ w23 + b23


if __name__ == "__main__":
    input_size, hidden_size, batch = 32, 64, 256
    key = jax.random.PRNGKey(0)
    k_x, k_p = jax.random.split(key)

    x = jax.random.normal(k_x, (batch, input_size), jnp.float32)
    params = init_params(k_p, input_size, hidden_size)

    act_bf16 = _supports_bf16_activations()
    out = regression_model_forward(x, params)          # default tiling -> 2-step "parallel" grid
    out = jax.block_until_ready(out)

    ref_f32 = reference_forward(x, params)
    ref_match = reference_forward_matched(x, params)

    assert out.shape == (batch, 1), out.shape
    tol = 1e-2 if act_bf16 else 1e-3
    assert jnp.allclose(out, ref_match, atol=tol, rtol=tol), "mismatch vs matched reference"
    assert jnp.allclose(out, ref_f32, atol=5e-2, rtol=5e-2), "mismatch vs f32 reference"

    print("KERNEL_OK")
</pallas_src>

<mosaic_0001>
module attributes {stable_mosaic.version = 11 : i64} {
  func.func @mlp_kernel(%arg0: i32, %arg1: memref<128x32xf32, #tpu.memory_space<vmem>>, %arg2: memref<64x32xbf16, #tpu.memory_space<vmem>>, %arg3: memref<64x1xf32, #tpu.memory_space<vmem>>, %arg4: memref<64x1xf32, #tpu.memory_space<vmem>>, %arg5: memref<1x1xf32, #tpu.memory_space<smem>>, %arg6: memref<1x128xf32, #tpu.memory_space<vmem>>) attributes {dimension_semantics = [#tpu.dimension_semantics<parallel>], iteration_bounds = array<i64: 2>, scalar_prefetch = 0 : i64, scratch_operands = 0 : i64, tpu.core_type = #tpu.core_type<tc>, window_params = [{transform_indices = @transform_0, window_bounds = array<i64: 128, 32>}, {pipeline_mode = #tpu.pipeline_mode<synchronous>, transform_indices = @transform_1, window_bounds = array<i64: 64, 32>}, {pipeline_mode = #tpu.pipeline_mode<synchronous>, transform_indices = @transform_2, window_bounds = array<i64: 64, 1>}, {pipeline_mode = #tpu.pipeline_mode<synchronous>, transform_indices = @transform_3, window_bounds = array<i64: 64, 1>}, {transform_indices = @transform_4, window_bounds = array<i64: 1, 1>}, {transform_indices = @transform_5, window_bounds = array<i64: 1, 128>}]} {
    %c0 = arith.constant 0 : index
    %c0_0 = arith.constant 0 : index
    %0 = vector.load %arg1[%c0, %c0_0] : memref<128x32xf32, #tpu.memory_space<vmem>>, vector<128x32xf32>
    %1 = arith.truncf %0 : vector<128x32xf32> to vector<128x32xbf16>
    %c0_1 = arith.constant 0 : index
    %c0_2 = arith.constant 0 : index
    %2 = vector.load %arg2[%c0_1, %c0_2] : memref<64x32xbf16, #tpu.memory_space<vmem>>, vector<64x32xbf16>
    %cst = arith.constant dense<0.000000e+00> : vector<64x128xf32>
    %3 = tpu.matmul %2, %1, %cst {dimension_numbers = #tpu.dot_dimension_numbers<[1], [1], [0], [0], [0, 0, 1, 0], [], []>} : vector<64x32xbf16>, vector<128x32xbf16>, vector<64x128xf32> -> vector<64x128xf32>
    %c0_3 = arith.constant 0 : index
    %c0_4 = arith.constant 0 : index
    %4 = vector.load %arg3[%c0_3, %c0_4] : memref<64x1xf32, #tpu.memory_space<vmem>>, vector<64x1xf32>
    %5 = vector.broadcast %4 : vector<64x1xf32> to vector<64x128xf32>
    %6 = arith.addf %3, %5 : vector<64x128xf32>
    %7 = math.tanh %6 : vector<64x128xf32>
    %c0_5 = arith.constant 0 : index
    %c0_6 = arith.constant 0 : index
    %8 = vector.load %arg4[%c0_5, %c0_6] : memref<64x1xf32, #tpu.memory_space<vmem>>, vector<64x1xf32>
    %9 = vector.broadcast %8 : vector<64x1xf32> to vector<64x128xf32>
    %10 = arith.mulf %7, %9 : vector<64x128xf32>
    %cst_7 = arith.constant dense<0.000000e+00> : vector<128xf32>
    %11 = vector.multi_reduction <add>, %10, %cst_7 [0] : vector<64x128xf32> to vector<128xf32>
    %12 = vector.shape_cast %11 : vector<128xf32> to vector<1x128xf32>
    %c0_8 = arith.constant 0 : index
    %c0_9 = arith.constant 0 : index
    %13 = memref.load %arg5[%c0_8, %c0_9] : memref<1x1xf32, #tpu.memory_space<smem>>
    %14 = vector.broadcast %13 : f32 to vector<1x128xf32>
    %15 = arith.addf %12, %14 : vector<1x128xf32>
    %c0_10 = arith.constant 0 : index
    %c0_11 = arith.constant 0 : index
    %16 = vector.load %arg6[%c0_10, %c0_11] : memref<1x128xf32, #tpu.memory_space<vmem>>, vector<1x128xf32>
    tpu.vector_store %arg6[%c0_10, %c0_11], %15 {strides = array<i32>} : memref<1x128xf32, #tpu.memory_space<vmem>>, vector<1x128xf32>,
    return
  }
  func.func @transform_0(%arg0: i32) -> (i32, i32) {
    %c0_i32 = arith.constant 0 : i32
    %c0_i32_0 = arith.constant 0 : i32
    return %arg0, %c0_i32 : i32, i32
  }
  func.func @transform_1(%arg0: i32) -> (i32, i32) {
    %c0_i32 = arith.constant 0 : i32
    %c0_i32_0 = arith.constant 0 : i32
    %c0_i32_1 = arith.constant 0 : i32
    return %c0_i32, %c0_i32_0 : i32, i32
  }
  func.func @transform_2(%arg0: i32) -> (i32, i32) {
    %c0_i32 = arith.constant 0 : i32
    %c0_i32_0 = arith.constant 0 : i32
    %c0_i32_1 = arith.constant 0 : i32
    return %c0_i32, %c0_i32_0 : i32, i32
  }
  func.func @transform_3(%arg0: i32) -> (i32, i32) {
    %c0_i32 = arith.constant 0 : i32
    %c0_i32_0 = arith.constant 0 : i32
    %c0_i32_1 = arith.constant 0 : i32
    return %c0_i32, %c0_i32_0 : i32, i32
  }
  func.func @transform_4(%arg0: i32) -> (i32, i32) {
    %c0_i32 = arith.constant 0 : i32
    %c0_i32_0 = arith.constant 0 : i32
    %c0_i32_1 = arith.constant 0 : i32
    return %c0_i32, %c0_i32_0 : i32, i32
  }
  func.func @transform_5(%arg0: i32) -> (i32, i32) {
    %c0_i32 = arith.constant 0 : i32
    %c0_i32_0 = arith.constant 0 : i32
    return %c0_i32, %arg0 : i32, i32
  }
}

</mosaic_0001>

<llo_original>
// kernel: _forward_impl.1
$region0: #{_forward_impl.1}
  #allocation0 [shape = 'u32[]', space=smem, size = 0x4, offset = 0x4, fixed_abs, tag = 'smem constant byte address 0x4 - core index']
  #allocation1 [shape = 'u32[144,128]{1,0:T(1,128)}', space=vmem, size = 0x12000, scoped, tag = 'internal scratch']
  #allocation2 [shape = 'f32[1,1]{1,0:T(1,128)S(6)}', space=smem, size = 0x200, scoped, tag = 'scoped memory for _forward_impl.1']
  %s0 = inlined_call_operand.vmem [shape: f32[256,32], index: 0, kind: input, shape index: {}]
  %s1 = inlined_call_operand.vmem [shape: bf16[64,32], index: 1, kind: input, shape index: {}]
  %s2 = inlined_call_operand.vmem [shape: f32[64,1], index: 2, kind: input, shape index: {}]
  %s3 = inlined_call_operand.vmem [shape: f32[64,1], index: 3, kind: input, shape index: {}]
  %s4 = inlined_call_operand.<no memory space> [shape: f32[1,1], index: 4, kind: input, shape index: {}]
  %s5 = inlined_call_operand.hbm [shape: f32[1,256], index: 5, kind: output, shape index: {}]
  %s6 = sld [smem:[#allocation0]]
  $region53: #{_forward_impl.1} parent=0
    _
  %s8 = ssub.s32 1, %s6
  %s9 = scalar_select 0, %s8, %s6
  %10 = sst [smem:[#allocation2]] %s4
  $region1: #{_forward_impl.1} parent=0
    #allocation3 [shape = 'u8[1024]{0}', space=vmem, size = 0x400, scoped, tag = 'output window, operand 0']
    #allocation4 [shape = 's32[2]{0}', space=sflag, size = 0x8, scoped, tag = 'scoped memory for _forward_impl.1']
    %11 = vsyncpa [#allocation4], 0
    %s12 = scalar_lea.sflag [#allocation4], 1
    %13 = vsyncpa %s12, 0
    loop: start=0, step=1, limit=4
    $region2: #{_forward_impl.1} parent=1 // loop_pre_header
      _
    $region3: #{_forward_impl.1} parent=1 // loop_header
      %s15 = sphi 0, %s19
      %p16 = scmp.ge.s32.totalorder %s15, 4
      %s25 = sphi 0, %s27
      %s28 = sphi 0, %s25
      %s29 = sphi 0, %s28
      %s45 = sphi 0, %s29
      %s49 = sphi 0, %s49
      %s51 = sphi 0, %s49
      %s52 = sphi 0, %s51
      %s66 = sphi 0, %s52
      %s70 = sphi 0, %s70
      %s72 = sphi 0, %s70
      %s73 = sphi 0, %s72
      %s87 = sphi 0, %s73
      %s91 = sphi 0, %s91
      %s93 = sphi 0, %s91
      %s94 = sphi 0, %s93
      %s108 = sphi 0, %s94
      %s112 = sphi 0, %s112
      %s114 = sphi 0, %s112
      %s115 = sphi 0, %s114
      %s129 = sphi 0, %s115
      %s135 = sphi 0, %s137
      %s138 = sphi 0, %s135
      %s139 = sphi 0, %s138
      %s155 = sphi 0, %s139
    $region4: #{_forward_impl.1} parent=1 // loop_header_branch
      %18 = sbr.rel (%p16) target = $region8
    $region5: #{_forward_impl.1} parent=1 // loop_body
      %s20 = ssub.s32 %s15, 1
      %s21 = ssub.s32 %s15, 2
      %s22 = sadd.s32 %s15, 1
      %s23 = ssub.s32 %s15, %s22
      %p24 = scmp.eq.s32.totalorder %s23, 0
      %s26 = sadd.s32 %s25, 1
      %s27 = scalar_select %p24, %s25, %s26
      %p30 = pneg %p24
      %p31 = scmp.eq.s32.totalorder %s15, 1
      %p32 = por %p30, %p31
      %p33 = scmp.ne.s32.totalorder %s25, %s28
      %p34 = scmp.eq.s32.totalorder %s15, 0
      %p35 = por %p33, %p34
      %p36 = scmp.ne.s32.totalorder %s25, %s28
      %p37 = scmp.eq.s32.totalorder %s20, 1
      %p38 = por %p36, %p37
      %p39 = scmp.ne.s32.totalorder %s28, %s29
      %p40 = scmp.eq.s32.totalorder %s20, 0
      %p41 = por %p39, %p40
      %p42 = scmp.ne.s32.totalorder %s28, %s29
      %p43 = scmp.eq.s32.totalorder %s21, 1
      %p44 = por %p42, %p43
      %p46 = scmp.ne.s32.totalorder %s29, %s45
      %p47 = scmp.eq.s32.totalorder %s21, 0
      %p48 = por %p46, %p47
      %s50 = sadd.s32 %s49, 1
      %p53 = scmp.eq.s32.totalorder %s15, 1
      %p54 = scmp.ne.s32.totalorder %s49, %s51
      %p55 = scmp.eq.s32.totalorder %s15, 0
      %p56 = por %p54, %p55
      %p57 = scmp.ne.s32.totalorder %s49, %s51
      %p58 = scmp.eq.s32.totalorder %s20, 1
      %p59 = por %p57, %p58
      %p60 = scmp.ne.s32.totalorder %s51, %s52
      %p61 = scmp.eq.s32.totalorder %s20, 0
      %p62 = por %p60, %p61
      %p63 = scmp.ne.s32.totalorder %s51, %s52
      %p64 = scmp.eq.s32.totalorder %s21, 1
      %p65 = por %p63, %p64
      %p67 = scmp.ne.s32.totalorder %s52, %s66
      %p68 = scmp.eq.s32.totalorder %s21, 0
      %p69 = por %p67, %p68
      %s71 = sadd.s32 %s70, 1
      %p74 = scmp.eq.s32.totalorder %s15, 1
      %p75 = scmp.ne.s32.totalorder %s70, %s72
      %p76 = scmp.eq.s32.totalorder %s15, 0
      %p77 = por %p75, %p76
      %p78 = scmp.ne.s32.totalorder %s70, %s72
      %p79 = scmp.eq.s32.totalorder %s20, 1
      %p80 = por %p78, %p79
      %p81 = scmp.ne.s32.totalorder %s72, %s73
      %p82 = scmp.eq.s32.totalorder %s20, 0
      %p83 = por %p81, %p82
      %p84 = scmp.ne.s32.totalorder %s72, %s73
      %p85 = scmp.eq.s32.totalorder %s21, 1
      %p86 = por %p84, %p85
      %p88 = scmp.ne.s32.totalorder %s73, %s87
      %p89 = scmp.eq.s32.totalorder %s21, 0
      %p90 = por %p88, %p89
      %s92 = sadd.s32 %s91, 1
      %p95 = scmp.eq.s32.totalorder %s15, 1
      %p96 = scmp.ne.s32.totalorder %s91, %s93
      %p97 = scmp.eq.s32.totalorder %s15, 0
      %p98 = por %p96, %p97
      %p99 = scmp.ne.s32.totalorder %s91, %s93
      %p100 = scmp.eq.s32.totalorder %s20, 1
      %p101 = por %p99, %p100
      %p102 = scmp.ne.s32.totalorder %s93, %s94
      %p103 = scmp.eq.s32.totalorder %s20, 0
      %p104 = por %p102, %p103
      %p105 = scmp.ne.s32.totalorder %s93, %s94
      %p106 = scmp.eq.s32.totalorder %s21, 1
      %p107 = por %p105, %p106
      %p109 = scmp.ne.s32.totalorder %s94, %s108
      %p110 = scmp.eq.s32.totalorder %s21, 0
      %p111 = por %p109, %p110
      %s113 = sadd.s32 %s112, 1
      %p116 = scmp.eq.s32.totalorder %s15, 1
      %p117 = scmp.ne.s32.totalorder %s112, %s114
      %p118 = scmp.eq.s32.totalorder %s15, 0
      %p119 = por %p117, %p118
      %p120 = scmp.ne.s32.totalorder %s112, %s114
      %p121 = scmp.eq.s32.totalorder %s20, 1
      %p122 = por %p120, %p121
      %p123 = scmp.ne.s32.totalorder %s114, %s115
      %p124 = scmp.eq.s32.totalorder %s20, 0
      %p125 = por %p123, %p124
      %p126 = scmp.ne.s32.totalorder %s114, %s115
      %p127 = scmp.eq.s32.totalorder %s21, 1
      %p128 = por %p126, %p127
      %p130 = scmp.ne.s32.totalorder %s115, %s129
      %p131 = scmp.eq.s32.totalorder %s21, 0
      %p132 = por %p130, %p131
      %s133 = ssub.s32 %s15, %s22
      %p134 = scmp.eq.s32.totalorder %s133, 0
      %s136 = sadd.s32 %s135, 1
      %s137 = scalar_select %p134, %s135, %s136
      %p140 = pneg %p134
      %p141 = scmp.eq.s32.totalorder %s15, 1
      %p142 = por %p140, %p141
      %p143 = scmp.ne.s32.totalorder %s135, %s138
      %p144 = scmp.eq.s32.totalorder %s15, 0
      %p145 = por %p143, %p144
      %p146 = scmp.ne.s32.totalorder %s135, %s138
      %p147 = scmp.eq.s32.totalorder %s20, 1
      %p148 = por %p146, %p147
      %p149 = scmp.ne.s32.totalorder %s138, %s139
      %p150 = scmp.eq.s32.totalorder %s20, 0
      %p151 = por %p149, %p150
      %p152 = scmp.ne.s32.totalorder %s138, %s139
      %p153 = scmp.eq.s32.totalorder %s21, 1
      %p154 = por %p152, %p153
      %p156 = scmp.ne.s32.totalorder %s139, %s155
      %p157 = scmp.eq.s32.totalorder %s21, 0
      %p158 = por %p156, %p157
      %p159 = scmp.le.s32.totalorder 1, %s15
      %p160 = scmp.lt.s32.totalorder %s15, 3
      %p161 = pnand %p159, %p160
      %p162 = pneg %p161
      // Predicated region
      $region9: #{_forward_impl.1} parent=5 // pred_check
        _
      $region10: #{_forward_impl.1} parent=5 // pred_check_branch
        %164 = sbr.rel (%p161) target = $region12
      $region11: #{_forward_impl.1} parent=5 // pred_region
        %s165 = ssub.s32 %s15, 1
        // Predicated region
        $region13: #{_forward_impl.1} parent=11 // pred_check
          %p166 = pneg %p62
        $region14: #{_forward_impl.1} parent=11 // pred_check_branch
          %168 = sbr.rel (%p166) target = $region16
        $region15: #{_forward_impl.1} parent=11 // pred_region
          _
        $region16: #{_forward_impl.1} parent=11 // pred_fallthru
          _
        // Predicated region
        $region17: #{_forward_impl.1} parent=11 // pred_check
          %p169 = pneg %p83
        $region18: #{_forward_impl.1} parent=11 // pred_check_branch
          %171 = sbr.rel (%p169) target = $region20
        $region19: #{_forward_impl.1} parent=11 // pred_region
          _
        $region20: #{_forward_impl.1} parent=11 // pred_fallthru
          _
        // Predicated region
        $region21: #{_forward_impl.1} parent=11 // pred_check
          %p172 = pneg %p104
        $region22: #{_forward_impl.1} parent=11 // pred_check_branch
          %174 = sbr.rel (%p172) target = $region24
        $region23: #{_forward_impl.1} parent=11 // pred_region
          _
        $region24: #{_forward_impl.1} parent=11 // pred_fallthru
          _
        // Predicated region
        $region25: #{_forward_impl.1} parent=11 // pred_check
          %p175 = pneg %p125
        $region26: #{_forward_impl.1} parent=11 // pred_check_branch
          %177 = sbr.rel (%p175) target = $region28
        $region27: #{_forward_impl.1} parent=11 // pred_region
          _
        $region28: #{_forward_impl.1} parent=11 // pred_fallthru
          _
      $region12: #{_forward_impl.1} parent=5 // pred_fallthru
        _
      %p178 = scmp.lt.s32.totalorder %s15, 2
      // Predicated region
      $region29: #{_forward_impl.1} parent=5 // pred_check
        %p179 = pneg %p178
      $region30: #{_forward_impl.1} parent=5 // pred_check_branch
        %181 = sbr.rel (%p179) target = $region32
      $region31: #{_forward_impl.1} parent=5 // pred_region
        // Predicated region
        $region33: #{_forward_impl.1} parent=31 // pred_check
          %p182 = pneg %p35
        $region34: #{_forward_impl.1} parent=31 // pred_check_branch
          %184 = sbr.rel (%p182) target = $region36
        $region35: #{_forward_impl.1} parent=31 // pred_region
          %s185 = smul.u32 16, %s15
          %p186 = scmp.lt.s32.totalorder %s185, 31
          %s187 = scalar_select %p186, %s185, 31
          %s188 = smul.addr %s187, 8
          %s189 = scalar_lea.vmem %s0, %s188
          %s190 = smul.u32 16, %s15
        $region36: #{_forward_impl.1} parent=31 // pred_fallthru
          _
      $region32: #{_forward_impl.1} parent=5 // pred_fallthru
        _
      %p191 = scmp.le.s32.totalorder 1, %s15
      %p192 = scmp.lt.s32.totalorder %s15, 3
      %p193 = pnand %p191, %p192
      %p194 = pneg %p193
      // Predicated region
      $region37: #{_forward_impl.1} parent=5 // pred_check
        _
      $region38: #{_forward_impl.1} parent=5 // pred_check_branch
        %196 = sbr.rel (%p193) target = $region40
      $region39: #{_forward_impl.1} parent=5 // pred_region
        %s197 = ssub.s32 %s15, 1
        %s198 = smul.u32 16, %s20
        %p199 = scmp.lt.s32.totalorder %s198, 31
        %s200 = scalar_select %p199, %s198, 31
        %s201 = smul.addr %s200, 8
        %s202 = scalar_lea.vmem %s0, %s201
        %p203 = pneg %p41
        %p204 = pneg %p38
        %p205 = pneg %p62
        %p206 = pneg %p59
        %p207 = pneg %p83
        %p208 = pneg %p80
        %p209 = pneg %p104
        %p210 = pneg %p101
        %p211 = pneg %p125
        %p212 = pneg %p122
        %p213 = pneg %p151
        %p214 = pneg %p148
        %s215 = sand.u32 %s138, 1
        %s216 = scalar_lea.sflag [#allocation4], %s215
        %s217 = sand.u32 %s138, 1
        %s218 = scalar_lea.vmem [#allocation3], %s217
        %s219 = smul.u32 16, %s20
        %p220 = scmp.lt.s32.totalorder %s219, 31
        %s221 = scalar_select %p220, %s219, 31
        %s222 = smul.addr %s221, 8
        %s223 = scalar_lea.vmem %s0, %s222
        %s224 = smul.u32 16, %s20
        %v226 = vld [vmem:[%s223] sm:$0xff]
        %v227 = vld [vmem:[%s223 + $0x8] sm:$0xff]
        %v228 = vld [vmem:[%s223 + $0x10] sm:$0xff]
        %v229 = vld [vmem:[%s223 + $0x18] sm:$0xff]
        %v230 = vld [vmem:[%s223 + $0x20] sm:$0xff]
        %v231 = vld [vmem:[%s223 + $0x28] sm:$0xff]
        %v232 = vld [vmem:[%s223 + $0x30] sm:$0xff]
        %v233 = vld [vmem:[%s223 + $0x38] sm:$0xff]
        %v234 = vld [vmem:[%s223 + $0x40] sm:$0xff]
        %v235 = vld [vmem:[%s223 + $0x48] sm:$0xff]
        %v236 = vld [vmem:[%s223 + $0x50] sm:$0xff]
        %v237 = vld [vmem:[%s223 + $0x58] sm:$0xff]
        %v238 = vld [vmem:[%s223 + $0x60] sm:$0xff]
        %v239 = vld [vmem:[%s223 + $0x68] sm:$0xff]
        %v240 = vld [vmem:[%s223 + $0x70] sm:$0xff]
        %v241 = vld [vmem:[%s223 + $0x78] sm:$0xff]
        %v242 = vpack.c.bf16 %v227, %v226
        %v243 = vpack.c.bf16 %v229, %v228
        %v244 = vpack.c.bf16 %v231, %v230
        %v245 = vpack.c.bf16 %v233, %v232
        %v246 = vpack.c.bf16 %v235, %v234
        %v247 = vpack.c.bf16 %v237, %v236
        %v248 = vpack.c.bf16 %v239, %v238
        %v249 = vpack.c.bf16 %v241, %v240
        %v250 = vld [vmem:[%s1] sm:$0xf]
        %v251 = vld [vmem:[%s1 + $0x4] sm:$0xf]
        %v252 = vld [vmem:[%s1 + $0x8] sm:$0xf]
        %v253 = vld [vmem:[%s1 + $0xc] sm:$0xf]
        %v254 = vld [vmem:[%s1 + $0x10] sm:$0xf]
        %v255 = vld [vmem:[%s1 + $0x14] sm:$0xf]
        %v256 = vld [vmem:[%s1 + $0x18] sm:$0xf]
        %v257 = vld [vmem:[%s1 + $0x1c] sm:$0xf]
        %v258 = vld [vmem:[%s2] sm:$0xff]
        %v259 = vld [vmem:[%s2 + $0x8] sm:$0xff]
        %v260 = vld [vmem:[%s2 + $0x10] sm:$0xff]
        %v261 = vld [vmem:[%s2 + $0x18] sm:$0xff]
        %v262 = vld [vmem:[%s2 + $0x20] sm:$0xff]
        %v263 = vld [vmem:[%s2 + $0x28] sm:$0xff]
        %v264 = vld [vmem:[%s2 + $0x30] sm:$0xff]
        %v265 = vld [vmem:[%s2 + $0x38] sm:$0xff]
        %267 = vset.pattern.permute.xlu0 0
        %268 = vperm.xlu0 %267, %v258
        %v269 = vpop.permute.xlu0 %268
        %272 = vset.pattern.permute.xlu0 0
        %273 = vperm.xlu0 %272, %v259
        %v274 = vpop.permute.xlu0 %273
        %277 = vset.pattern.permute.xlu0 0
        %278 = vperm.xlu0 %277, %v260
        %v279 = vpop.permute.xlu0 %278
        %282 = vset.pattern.permute.xlu0 0
        %283 = vperm.xlu0 %282, %v261
        %v284 = vpop.permute.xlu0 %283
        %287 = vset.pattern.permute.xlu0 0
        %288 = vperm.xlu0 %287, %v262
        %v289 = vpop.permute.xlu0 %288
        %292 = vset.pattern.permute.xlu0 0
        %293 = vperm.xlu0 %292, %v263
        %v294 = vpop.permute.xlu0 %293
        %297 = vset.pattern.permute.xlu0 0
        %298 = vperm.xlu0 %297, %v264
        %v299 = vpop.permute.xlu0 %298
        %302 = vset.pattern.permute.xlu0 0
        %303 = vperm.xlu0 %302, %v265
        %v304 = vpop.permute.xlu0 %303
        %v314 = vunpack.c.l.b16 %v250
        %v315 = vunpack.c.l.b16 %v251
        %v316 = vunpack.c.l.b16 %v252
        %v317 = vunpack.c.l.b16 %v253
        %v318 = vunpack.c.l.b16 %v254
        %v319 = vunpack.c.l.b16 %v255
        %v320 = vunpack.c.l.b16 %v256
        %v321 = vunpack.c.l.b16 %v257
        %v322 = vpack.c.b16 %v315, %v314
        %v323 = vpack.c.b16 %v317, %v316
        %v324 = vpack.c.b16 %v319, %v318
        %v325 = vpack.c.b16 %v321, %v320
        %vm326 = vcmask 261120
        %v328 = vsel %vm326, %v322, 0
        %v331 = vsel %vm326, %v323, 0
        %v334 = vsel %vm326, %v324, 0
        %v337 = vsel %vm326, %v325, 0
        %v340 = vsel %vm326, %v242, 0
        %v343 = vsel %vm326, %v243, 0
        %v346 = vsel %vm326, %v244, 0
        %v349 = vsel %vm326, %v245, 0
        %v352 = vsel %vm326, %v246, 0
        %v355 = vsel %vm326, %v247, 0
        %v358 = vsel %vm326, %v248, 0
        %v361 = vsel %vm326, %v249, 0
        %363 = vmatprep.subr.bf16.mxu0 0
        %364 = vmatpush1.bf16.xpose.msra.mxu0 %v340
        %365 = vmatprep.subr.bf16.mxu0 0
        %366 = vmatpush1.bf16.xpose.msra.mxu0 %v343
        %367 = vmatprep.subr.bf16.mxu0 0
        %368 = vmatpush1.bf16.xpose.msra.mxu0 %v346
        %369 = vmatprep.subr.bf16.mxu0 0
        %370 = vmatpush1.bf16.xpose.msra.mxu0 %v349
        %371 = vmatprep.subr.bf16.mxu0 0
        %372 = vmatpush1.bf16.xpose.msra.mxu0 %v352
        %373 = vmatprep.subr.bf16.mxu0 0
        %374 = vmatpush1.bf16.xpose.msra.mxu0 %v355
        %375 = vmatprep.subr.bf16.mxu0 0
        %376 = vmatpush1.bf16.xpose.msra.mxu0 %v358
        %377 = vmatprep.subr.bf16.mxu0 0
        %378 = vmatpush1.bf16.xpose.msra.mxu0 %v361
        %379 = vmatprep.subr.bf16.mxu0 0
        %380 = vmatpush1.bf16.xpose.msra.mxu0 0
        %381 = vmatprep.subr.bf16.mxu0 0
        %382 = vmatpush1.bf16.xpose.msra.mxu0 0
        %383 = vmatprep.subr.bf16.mxu0 0
        %384 = vmatpush1.bf16.xpose.msra.mxu0 0
        %385 = vmatprep.subr.bf16.mxu0 0
        %386 = vmatpush1.bf16.xpose.msra.mxu0 0
        %387 = vmatprep.subr.bf16.mxu0 0
        %388 = vmatpush1.bf16.xpose.msra.mxu0 0
        %389 = vmatprep.subr.bf16.mxu0 0
        %390 = vmatpush1.bf16.xpose.msra.mxu0 0
        %391 = vmatprep.subr.bf16.mxu0 0
        %392 = vmatpush1.bf16.xpose.msra.mxu0 0
        %393 = vmatprep.subr.bf16.mxu0 0
        %394 = vmatpush1.bf16.xpose.msra.mxu0 0
        %395 = vmatprep.mubr.bf16.mxu0 0
        %396 = vmatmul.mubr.bf16.gmra.mrb[0].mxu0 %v328
        %v397 = vpop.f32.mrb[0].mxu0
        %v398 = vadd.f32 %v269, %v397
        %v399 = vpop.f32.mrb[0].mxu0
        %v400 = vpop.f32.mrb[0].mxu0
        %v401 = vadd.f32 %v274, %v400
        %v402 = vpop.f32.mrb[0].mxu0
        %403 = vmatprep.mubr.bf16.mxu0 0
        %404 = vmatmul.mubr.bf16.gmra.mrb[0].mxu0 %v331
        %v405 = vpop.f32.mrb[0].mxu0
        %v406 = vadd.f32 %v279, %v405
        %v407 = vpop.f32.mrb[0].mxu0
        %v408 = vpop.f32.mrb[0].mxu0
        %v409 = vadd.f32 %v284, %v408
        %v410 = vpop.f32.mrb[0].mxu0
        %411 = vmatprep.mubr.bf16.mxu0 0
        %412 = vmatmul.mubr.bf16.gmra.mrb[0].mxu0 %v334
        %v413 = vpop.f32.mrb[0].mxu0
        %v414 = vadd.f32 %v289, %v413
        %v415 = vpop.f32.mrb[0].mxu0
        %v416 = vpop.f32.mrb[0].mxu0
        %v417 = vadd.f32 %v294, %v416
        %v418 = vpop.f32.mrb[0].mxu0
        %419 = vmatprep.mubr.bf16.mxu0 0
        %420 = vmatmul.mubr.bf16.gmra.mrb[0].mxu0 %v337
        %v421 = vpop.f32.mrb[0].mxu0
        %v422 = vadd.f32 %v299, %v421
        %v423 = vpop.f32.mrb[0].mxu0
        %v424 = vpop.f32.mrb[0].mxu0
        %v425 = vadd.f32 %v304, %v424
        %v426 = vpop.f32.mrb[0].mxu0
        %427 = vdwg.mxu0
        %v428 = vtanh.pop %v398
        %v429 = vtanh.pop %v401
        %v430 = vtanh.pop %v406
        %v431 = vtanh.pop %v409
        %v432 = vtanh.pop %v414
        %v433 = vtanh.pop %v417
        %v434 = vtanh.pop %v422
        %v435 = vtanh.pop %v425
        %v436 = vld [vmem:[%s3] sm:$0xff]
        %v437 = vld [vmem:[%s3 + $0x8] sm:$0xff]
        %v438 = vld [vmem:[%s3 + $0x10] sm:$0xff]
        %v439 = vld [vmem:[%s3 + $0x18] sm:$0xff]
        %v440 = vld [vmem:[%s3 + $0x20] sm:$0xff]
        %v441 = vld [vmem:[%s3 + $0x28] sm:$0xff]
        %v442 = vld [vmem:[%s3 + $0x30] sm:$0xff]
        %v443 = vld [vmem:[%s3 + $0x38] sm:$0xff]
        %445 = vset.pattern.permute.xlu0 0
        %446 = vperm.xlu0 %445, %v436
        %v447 = vpop.permute.xlu0 %446
        %450 = vset.pattern.permute.xlu0 0
        %451 = vperm.xlu0 %450, %v437
        %v452 = vpop.permute.xlu0 %451
        %455 = vset.pattern.permute.xlu0 0
        %456 = vperm.xlu0 %455, %v438
        %v457 = vpop.permute.xlu0 %456
        %460 = vset.pattern.permute.xlu0 0
        %461 = vperm.xlu0 %460, %v439
        %v462 = vpop.permute.xlu0 %461
        %465 = vset.pattern.permute.xlu0 0
        %466 = vperm.xlu0 %465, %v440
        %v467 = vpop.permute.xlu0 %466
        %470 = vset.pattern.permute.xlu0 0
        %471 = vperm.xlu0 %470, %v441
        %v472 = vpop.permute.xlu0 %471
        %475 = vset.pattern.permute.xlu0 0
        %476 = vperm.xlu0 %475, %v442
        %v477 = vpop.permute.xlu0 %476
        %480 = vset.pattern.permute.xlu0 0
        %481 = vperm.xlu0 %480, %v443
        %v482 = vpop.permute.xlu0 %481
        %v484 = vmul.f32 %v428, %v447
        %v485 = vmul.f32 %v429, %v452
        %v486 = vmul.f32 %v430, %v457
        %v487 = vmul.f32 %v431, %v462
        %v488 = vmul.f32 %v432, %v467
        %v489 = vmul.f32 %v433, %v472
        %v490 = vmul.f32 %v434, %v477
        %v491 = vmul.f32 %v435, %v482
        %v492 = vadd.f32 %v484, %v485
        %v493 = vadd.f32 %v492, %v486
        %v494 = vadd.f32 %v493, %v487
        %v495 = vadd.f32 %v494, %v488
        %v496 = vadd.f32 %v495, %v489
        %v497 = vadd.f32 %v496, %v490
        %v498 = vadd.f32 %v497, %v491
        %v499 = vrot.slane %v498, 4
        %v500 = vadd.f32 %v498, %v499
        %v501 = vrot.slane %v500, 2
        %v502 = vadd.f32 %v500, %v501
        %v503 = vrot.slane %v502, 1
        %v504 = vadd.f32 %v502, %v503
        %s505 = sld [smem:[#allocation2]]
        %v506 = vstv %s505
        %v507 = vadd.f32 %v504, %v506
        %508 = vst [vmem:[%s218] sm:$0x1] %v507
        %s509 = sand.u32 %s138, 1
        %s510 = scalar_lea.sflag [#allocation4], %s509
        %s511 = sand.u32 %s138, 1
        %s512 = scalar_lea.vmem [#allocation3], %s511
        // Predicated region
        $region41: #{_forward_impl.1} parent=39 // pred_check
          %p513 = pneg %p148
        $region42: #{_forward_impl.1} parent=39 // pred_check_branch
          %515 = sbr.rel (%p513) target = $region44
        $region43: #{_forward_impl.1} parent=39 // pred_region
          %s517 = ssub.s32 16, 16
          %518 = vsyncadd %s510, %s517
          %s519 = smul.addr %s20, 16
          %s520 = scalar_lea.hbm %s5, %s519
          %s522 = sshll.u32 %s512, 4
          %s523 = int_to_ptr.vmem [resolvable:$true] %s522
          %525 = dma.vmem_to_hbm [thread:$0]  %s523, 16, %s520, %s510
        $region44: #{_forward_impl.1} parent=39 // pred_fallthru
          _
      $region40: #{_forward_impl.1} parent=5 // pred_fallthru
        _
      %p526 = scmp.le.s32.totalorder 2, %s15
      // Predicated region
      $region45: #{_forward_impl.1} parent=5 // pred_check
        %p527 = pneg %p526
      $region46: #{_forward_impl.1} parent=5 // pred_check_branch
        %529 = sbr.rel (%p527) target = $region48
      $region47: #{_forward_impl.1} parent=5 // pred_region
        %s530 = ssub.s32 %s15, 2
        // Predicated region
        $region49: #{_forward_impl.1} parent=47 // pred_check
          %p531 = pneg %p154
        $region50: #{_forward_impl.1} parent=47 // pred_check_branch
          %533 = sbr.rel (%p531) target = $region52
        $region51: #{_forward_impl.1} parent=47 // pred_region
          %s534 = sand.u32 %s139, 1
          %s535 = scalar_lea.sflag [#allocation4], %s534
          %s536 = sand.u32 %s139, 1
          %s537 = scalar_lea.vmem [#allocation3], %s536
          %538 = dma.done %s535, 16
        $region52: #{_forward_impl.1} parent=47 // pred_fallthru
          _
      $region48: #{_forward_impl.1} parent=5 // pred_fallthru
        _
    $region6: #{_forward_impl.1} parent=1 // loop_footer
      %s19 = sadd.s32 1, %s15
    $region7: #{_forward_impl.1} parent=1 // loop_footer_branch
      %14 = sbr.rel target = $region3
    $region8: #{_forward_impl.1} parent=1 // loop_exit
      _
    %539 = vsyncpa [#allocation4], 1
    %s540 = scalar_lea.sflag [#allocation4], 1
    %541 = vsyncpa %s540, 1

</llo_original>
